<compile_context>
chip_gen: v5e
topology: v5e:2x2
jax: 0.10.0
libtpu: 0.0.40
codegen_flags: <defaults>
</compile_context>

<pallas_src>
import jax
import jax.numpy as jnp
from jax import lax
from jax.experimental import pallas as pl
from jax.experimental.pallas import tpu as pltpu

BATCH = 20          # fixed by torch.zeros([20, 4]) in the reference module
HEAD_COLS = 7       # 3 xyz + 4 wpqr columns per auxiliary head
N_HEADS = 3
COLS = HEAD_COLS * N_HEADS   # 21


def _pose_loss_kernel(w_ref, p_ref, g_ref, out_ref):
    # w_ref : (6,)  f32 SMEM  [w1_xyz, w2_xyz, w3_xyz, w1_wpqr, w2_wpqr, w3_wpqr]
    # p_ref : (20, 21) f32 VMEM  predictions, heads side by side
    # g_ref : (20, 21) f32 VMEM  [gt_xyz | gt_q] tiled 3x (column-aligned with p)
    # out_ref: (1, 1) f32 SMEM   scalar loss
    p = p_ref[...]
    g = g_ref[...]
    col = lax.broadcasted_iota(jnp.int32, p.shape, 1)

    # Quaternion columns within each 7-wide head block (3:7, 10:14, 17:21).
    is_q = (((col >= 3) & (col < 7))
            | ((col >= 10) & (col < 14))
            | ((col >= 17) & (col < 21)))

    # S = sum(gt_q^2) over the single gt copy (columns 3:7 of the tiled slab).
    # Reference: mse(gt_q, zeros) = S / 80, target quat = gt_q * 80 / S.
    s = jnp.sum(jnp.where((col >= 3) & (col < 7), g * g, 0.0))
    scale = 80.0 / s

    # Direct-form difference (matches the PyTorch module's numerics; no
    # catastrophic cancellation from an expanded-MSE formulation).
    tgt = jnp.where(is_q, g * scale, g)
    d = p - tgt

    # Fold the per-head loss weights and the MSE denominators (60 for xyz,
    # 80 for wpqr) into a per-column weight, then reduce once.
    w1x, w2x, w3x = w_ref[0], w_ref[1], w_ref[2]
    w1q, w2q, w3q = w_ref[3], w_ref[4], w_ref[5]
    wx = jnp.where(col < 7, w1x, jnp.where(col < 14, w2x, w3x))
    wq = jnp.where(col < 7, w1q, jnp.where(col < 14, w2q, w3q))
    w = wx * jnp.where(is_q, wq * (1.0 / 80.0), 1.0 / 60.0)

    out_ref[0, 0] = jnp.sum(w * d * d)


def pose_loss(p1_xyz, p1_wpqr, p2_xyz, p2_wpqr, p3_xyz, p3_wpqr, poseGT,
              w1_xyz, w2_xyz, w3_xyz, w1_wpqr, w2_wpqr, w3_wpqr):
    """PoseNet auxiliary-head pose loss (forward)."""
    f32 = jnp.float32
    # Two single-concatenate slabs; the gt slab is tiled so it is already
    # column-aligned with the prediction slab (kernel stays element-wise).
    preds = jnp.concatenate(
        [p1_xyz, p1_wpqr, p2_xyz, p2_wpqr, p3_xyz, p3_wpqr], axis=1
    ).astype(f32)                                            # (20, 21)
    gts = jnp.concatenate([poseGT, poseGT, poseGT], axis=1).astype(f32)  # (20, 21)

    # Loss weights as a traced (6,) vector in SMEM -> no recompile when the
    # weight values change (they may be Python floats or JAX scalars).
    w = jnp.stack([jnp.asarray(w1_xyz, f32), jnp.asarray(w2_xyz, f32),
                   jnp.asarray(w3_xyz, f32), jnp.asarray(w1_wpqr, f32),
                   jnp.asarray(w2_wpqr, f32), jnp.asarray(w3_wpqr, f32)])

    out = pl.pallas_call(
        _pose_loss_kernel,
        out_shape=jax.ShapeDtypeStruct((1, 1), jnp.float32),
        in_specs=[pl.BlockSpec(memory_space=pltpu.MemorySpace.SMEM),
                  pl.BlockSpec(memory_space=pltpu.MemorySpace.VMEM),
                  pl.BlockSpec(memory_space=pltpu.MemorySpace.VMEM)],
        out_specs=pl.BlockSpec(memory_space=pltpu.MemorySpace.SMEM),
        # ~3.4 KB total traffic, a few thousand VPU flops, no transcendentals.
        cost_estimate=pl.CostEstimate(flops=6000, bytes_accessed=3400,
                                      transcendentals=0),
    )(w, preds, gts)
    return out[0, 0]


def _pose_loss_ref(p1_xyz, p1_wpqr, p2_xyz, p2_wpqr, p3_xyz, p3_wpqr, poseGT,
                   w1_xyz, w2_xyz, w3_xyz, w1_wpqr, w2_wpqr, w3_wpqr):
    gt_xyz = poseGT[:, 0:3]
    gt_q = poseGT[:, 3:7]
    mse = lambda a, b: jnp.mean((a - b) ** 2)
    tgt_q = gt_q / mse(gt_q, jnp.zeros((BATCH, 4), jnp.float32))
    l1 = mse(p1_xyz, gt_xyz) + w1_wpqr * mse(p1_wpqr, tgt_q)
    l2 = mse(p2_xyz, gt_xyz) + w2_wpqr * mse(p2_wpqr, tgt_q)
    l3 = mse(p3_xyz, gt_xyz) + w3_wpqr * mse(p3_wpqr, tgt_q)
    return w1_xyz * l1 + w2_xyz * l2 + w3_xyz * l3


if __name__ == "__main__":
    key = jax.random.PRNGKey(0)
    ks = jax.random.split(key, 7)
    p1_xyz = jax.random.normal(ks[0], (BATCH, 3), jnp.float32)
    p1_wpqr = jax.random.normal(ks[1], (BATCH, 4), jnp.float32)
    p2_xyz = jax.random.normal(ks[2], (BATCH, 3), jnp.float32)
    p2_wpqr = jax.random.normal(ks[3], (BATCH, 4), jnp.float32)
    p3_xyz = jax.random.normal(ks[4], (BATCH, 3), jnp.float32)
    p3_wpqr = jax.random.normal(ks[5], (BATCH, 4), jnp.float32)
    poseGT = jax.random.normal(ks[6], (BATCH, 7), jnp.float32)

    # Standard PoseNet-style loss weights, passed as JAX scalars so they are
    # traced values (changing them does not trigger recompilation).
    w1_xyz, w2_xyz, w3_xyz = jnp.float32(0.3), jnp.float32(0.3), jnp.float32(1.0)
    w1_wpqr, w2_wpqr, w3_wpqr = (jnp.float32(150.0), jnp.float32(150.0),
                                 jnp.float32(500.0))

    loss_fn = jax.jit(pose_loss)
    loss = loss_fn(p1_xyz, p1_wpqr, p2_xyz, p2_wpqr, p3_xyz, p3_wpqr, poseGT,
                   w1_xyz, w2_xyz, w3_xyz, w1_wpqr, w2_wpqr, w3_wpqr)
    loss = jax.block_until_ready(loss)

    ref = _pose_loss_ref(p1_xyz, p1_wpqr, p2_xyz, p2_wpqr, p3_xyz, p3_wpqr,
                         poseGT, w1_xyz, w2_xyz, w3_xyz,
                         w1_wpqr, w2_wpqr, w3_wpqr)
    # Direct-form in-kernel numerics (no expanded-MSE cancellation) -> tight
    # tolerance is fine; only summation order differs from the reference.
    assert jnp.allclose(loss, ref, rtol=1e-5, atol=1e-5), (loss, ref)
    print("KERNEL_OK")
</pallas_src>

<mosaic_0001>
module attributes {stable_mosaic.version = 11 : i64} {
  func.func @_pose_loss_kernel(%arg0: memref<6xf32, #tpu.memory_space<smem>>, %arg1: memref<20x21xf32, #tpu.memory_space<vmem>>, %arg2: memref<20x21xf32, #tpu.memory_space<vmem>>, %arg3: memref<1x1xf32, #tpu.memory_space<smem>>) attributes {dimension_semantics = [], scalar_prefetch = 0 : i64, scratch_operands = 0 : i64, tpu.core_type = #tpu.core_type<tc>} {
    %c0 = arith.constant 0 : index
    %c0_0 = arith.constant 0 : index
    %0 = vector.load %arg1[%c0, %c0_0] : memref<20x21xf32, #tpu.memory_space<vmem>>, vector<20x21xf32>
    %c0_1 = arith.constant 0 : index
    %c0_2 = arith.constant 0 : index
    %1 = vector.load %arg2[%c0_1, %c0_2] : memref<20x21xf32, #tpu.memory_space<vmem>>, vector<20x21xf32>
    %2 = tpu.iota {dimensions = array<i32: 1>} : vector<20x21xi32>
    %c3_i32 = arith.constant 3 : i32
    %3 = vector.broadcast %c3_i32 : i32 to vector<20x21xi32>
    %4 = arith.cmpi sge, %2, %3 : vector<20x21xi32>
    %c7_i32 = arith.constant 7 : i32
    %5 = vector.broadcast %c7_i32 : i32 to vector<20x21xi32>
    %6 = arith.cmpi slt, %2, %5 : vector<20x21xi32>
    %7 = arith.andi %4, %6 : vector<20x21xi1>
    %c10_i32 = arith.constant 10 : i32
    %8 = vector.broadcast %c10_i32 : i32 to vector<20x21xi32>
    %9 = arith.cmpi sge, %2, %8 : vector<20x21xi32>
    %c14_i32 = arith.constant 14 : i32
    %10 = vector.broadcast %c14_i32 : i32 to vector<20x21xi32>
    %11 = arith.cmpi slt, %2, %10 : vector<20x21xi32>
    %12 = arith.andi %9, %11 : vector<20x21xi1>
    %13 = arith.ori %7, %12 : vector<20x21xi1>
    %c17_i32 = arith.constant 17 : i32
    %14 = vector.broadcast %c17_i32 : i32 to vector<20x21xi32>
    %15 = arith.cmpi sge, %2, %14 : vector<20x21xi32>
    %c21_i32 = arith.constant 21 : i32
    %16 = vector.broadcast %c21_i32 : i32 to vector<20x21xi32>
    %17 = arith.cmpi slt, %2, %16 : vector<20x21xi32>
    %18 = arith.andi %15, %17 : vector<20x21xi1>
    %19 = arith.ori %13, %18 : vector<20x21xi1>
    %c3_i32_3 = arith.constant 3 : i32
    %20 = vector.broadcast %c3_i32_3 : i32 to vector<20x21xi32>
    %21 = arith.cmpi sge, %2, %20 : vector<20x21xi32>
    %c7_i32_4 = arith.constant 7 : i32
    %22 = vector.broadcast %c7_i32_4 : i32 to vector<20x21xi32>
    %23 = arith.cmpi slt, %2, %22 : vector<20x21xi32>
    %24 = arith.andi %21, %23 : vector<20x21xi1>
    %25 = arith.mulf %1, %1 : vector<20x21xf32>
    %cst = arith.constant 0.000000e+00 : f32
    %26 = vector.broadcast %cst : f32 to vector<20x21xf32>
    %27 = arith.select %24, %25, %26 : vector<20x21xi1>, vector<20x21xf32>
    %28 = vector.shape_cast %27 : vector<20x21xf32> to vector<1x20x21xf32>
    %cst_5 = arith.constant dense<0.000000e+00> : vector<1xf32>
    %29 = vector.multi_reduction <add>, %28, %cst_5 [1, 2] : vector<1x20x21xf32> to vector<1xf32>
    %30 = vector.shape_cast %29 : vector<1xf32> to vector<1x1x1xf32>
    %31 = vector.extract %30[0, 0, 0] : f32 from vector<1x1x1xf32>
    %cst_6 = arith.constant 8.000000e+01 : f32
    %32 = arith.divf %cst_6, %31 : f32
    %33 = vector.broadcast %32 : f32 to vector<20x21xf32>
    %34 = arith.mulf %1, %33 : vector<20x21xf32>
    %35 = arith.select %19, %34, %1 : vector<20x21xi1>, vector<20x21xf32>
    %36 = arith.subf %0, %35 : vector<20x21xf32>
    %c0_7 = arith.constant 0 : index
    %37 = memref.load %arg0[%c0_7] : memref<6xf32, #tpu.memory_space<smem>>
    %c1 = arith.constant 1 : index
    %38 = memref.load %arg0[%c1] : memref<6xf32, #tpu.memory_space<smem>>
    %c2 = arith.constant 2 : index
    %39 = memref.load %arg0[%c2] : memref<6xf32, #tpu.memory_space<smem>>
    %c3 = arith.constant 3 : index
    %40 = memref.load %arg0[%c3] : memref<6xf32, #tpu.memory_space<smem>>
    %c4 = arith.constant 4 : index
    %41 = memref.load %arg0[%c4] : memref<6xf32, #tpu.memory_space<smem>>
    %c5 = arith.constant 5 : index
    %42 = memref.load %arg0[%c5] : memref<6xf32, #tpu.memory_space<smem>>
    %c7_i32_8 = arith.constant 7 : i32
    %43 = vector.broadcast %c7_i32_8 : i32 to vector<20x21xi32>
    %44 = arith.cmpi slt, %2, %43 : vector<20x21xi32>
    %c14_i32_9 = arith.constant 14 : i32
    %45 = vector.broadcast %c14_i32_9 : i32 to vector<20x21xi32>
    %46 = arith.cmpi slt, %2, %45 : vector<20x21xi32>
    %47 = vector.broadcast %38 : f32 to vector<20x21xf32>
    %48 = vector.broadcast %39 : f32 to vector<20x21xf32>
    %49 = arith.select %46, %47, %48 : vector<20x21xi1>, vector<20x21xf32>
    %50 = vector.broadcast %37 : f32 to vector<20x21xf32>
    %51 = arith.select %44, %50, %49 : vector<20x21xi1>, vector<20x21xf32>
    %c7_i32_10 = arith.constant 7 : i32
    %52 = vector.broadcast %c7_i32_10 : i32 to vector<20x21xi32>
    %53 = arith.cmpi slt, %2, %52 : vector<20x21xi32>
    %c14_i32_11 = arith.constant 14 : i32
    %54 = vector.broadcast %c14_i32_11 : i32 to vector<20x21xi32>
    %55 = arith.cmpi slt, %2, %54 : vector<20x21xi32>
    %56 = vector.broadcast %41 : f32 to vector<20x21xf32>
    %57 = vector.broadcast %42 : f32 to vector<20x21xf32>
    %58 = arith.select %55, %56, %57 : vector<20x21xi1>, vector<20x21xf32>
    %59 = vector.broadcast %40 : f32 to vector<20x21xf32>
    %60 = arith.select %53, %59, %58 : vector<20x21xi1>, vector<20x21xf32>
    %cst_12 = arith.constant 1.250000e-02 : f32
    %61 = vector.broadcast %cst_12 : f32 to vector<20x21xf32>
    %62 = arith.mulf %60, %61 : vector<20x21xf32>
    %cst_13 = arith.constant 0.0166666675 : f32
    %63 = vector.broadcast %cst_13 : f32 to vector<20x21xf32>
    %64 = arith.select %19, %62, %63 : vector<20x21xi1>, vector<20x21xf32>
    %65 = arith.mulf %51, %64 : vector<20x21xf32>
    %66 = arith.mulf %65, %36 : vector<20x21xf32>
    %67 = arith.mulf %66, %36 : vector<20x21xf32>
    %68 = vector.shape_cast %67 : vector<20x21xf32> to vector<1x20x21xf32>
    %cst_14 = arith.constant dense<0.000000e+00> : vector<1xf32>
    %69 = vector.multi_reduction <add>, %68, %cst_14 [1, 2] : vector<1x20x21xf32> to vector<1xf32>
    %70 = vector.shape_cast %69 : vector<1xf32> to vector<1x1x1xf32>
    %71 = vector.extract %70[0, 0, 0] : f32 from vector<1x1x1xf32>
    %c0_15 = arith.constant 0 : index
    %c0_16 = arith.constant 0 : index
    %72 = memref.load %arg3[%c0_15, %c0_16] : memref<1x1xf32, #tpu.memory_space<smem>>
    memref.store %71, %arg3[%c0_15, %c0_16] : memref<1x1xf32, #tpu.memory_space<smem>>
    return
  }
}

</mosaic_0001>

<llo_original>
// kernel: pose_loss.1
$region0: #{pose_loss.1}
  #allocation0 [shape = 'u32[]', space=smem, size = 0x4, offset = 0x4, fixed_abs, tag = 'smem constant byte address 0x4 - core index']
  #allocation1 [shape = 'u32[72,128]{1,0:T(1,128)}', space=vmem, size = 0x9000, scoped, tag = 'internal scratch']
  %s0 = inlined_call_operand.vmem [shape: f32[6], index: 0, kind: input, shape index: {}]
  %s1 = inlined_call_operand.vmem [shape: f32[20,21], index: 1, kind: input, shape index: {}]
  %s2 = inlined_call_operand.vmem [shape: f32[20,21], index: 2, kind: input, shape index: {}]
  %s3 = inlined_call_operand.hbm [shape: f32[1,1], index: 3, kind: output, shape index: {}]
  %s4 = sld [smem:[#allocation0]]
  $region26: #{pose_loss.1} parent=0
    _
  %s6 = ssub.s32 1, %s4
  %s7 = scalar_select 0, %s6, %s4
  $region1: #{pose_loss.1} parent=0
    #allocation2 [shape = 'u8[512]{0}', space=smem, size = 0x200, scoped, tag = 'input window, operand 0, single buffered']
    #allocation3 [shape = 's32[1]{0}', space=sflag, size = 0x4, scoped, tag = 'scoped memory for pose_loss.1']
    #allocation4 [shape = 's32[1]{0}', space=sflag, size = 0x4, scoped, tag = 'scoped memory for pose_loss.1']
    #allocation5 [shape = 'u8[512]{0}', space=smem, size = 0x200, scoped, tag = 'output window, operand 0, single buffered']
    %8 = vsyncpa [#allocation4], 0
    %9 = vsyncpa [#allocation3], 0
    // Predicated region
    $region2: #{pose_loss.1} parent=1 // pred_check
      _
    $region3: #{pose_loss.1} parent=1 // pred_check_branch
      %11 = sbr.rel (0) target = $region5
    $region4: #{pose_loss.1} parent=1 // pred_region
      %13 = vsyncadd [#allocation4], 0
      %s15 = sshll.u32 %s0, 4
      %s16 = int_to_ptr.vmem [resolvable:$true] %s15
      %18 = dma.vmem_to_smem %s16, 16, [#allocation2], [#allocation4]
    $region5: #{pose_loss.1} parent=1 // pred_fallthru
      _
    // Predicated region
    $region6: #{pose_loss.1} parent=1 // pred_check
      _
    $region7: #{pose_loss.1} parent=1 // pred_check_branch
      %20 = sbr.rel (0) target = $region9
    $region8: #{pose_loss.1} parent=1 // pred_region
      _
    $region9: #{pose_loss.1} parent=1 // pred_fallthru
      _
    // Predicated region
    $region10: #{pose_loss.1} parent=1 // pred_check
      _
    $region11: #{pose_loss.1} parent=1 // pred_check_branch
      %22 = sbr.rel (0) target = $region13
    $region12: #{pose_loss.1} parent=1 // pred_region
      _
    $region13: #{pose_loss.1} parent=1 // pred_fallthru
      _
    // Predicated region
    $region14: #{pose_loss.1} parent=1 // pred_check
      _
    $region15: #{pose_loss.1} parent=1 // pred_check_branch
      %24 = sbr.rel (0) target = $region17
    $region16: #{pose_loss.1} parent=1 // pred_region
      %26 = dma.done [#allocation4], 16
    $region17: #{pose_loss.1} parent=1 // pred_fallthru
      _
    %27 = sfence
    %v28 = vld [vmem:[%s1] sm:$0xff]
    %v29 = vld [vmem:[%s1 + $0x8] sm:$0xff]
    %v30 = vld [vmem:[%s1 + $0x10] sm:$0xf]
    %v31 = vld [vmem:[%s2] sm:$0xff]
    %v32 = vld [vmem:[%s2 + $0x8] sm:$0xff]
    %v33 = vld [vmem:[%s2 + $0x10] sm:$0xf]
    %v34 = vlaneseq
    %v35 = vand.u32 %v34, 127
    %vm36 = vcmp.ge.s32.totalorder %v35, 3
    %vm37 = vcmp.lt.s32.totalorder %v35, 7
    %vm38 = vmand %vm36, %vm37
    %vm39 = vcmp.ge.s32.totalorder %v35, 10
    %vm40 = vcmp.lt.s32.totalorder %v35, 14
    %vm41 = vmand %vm39, %vm40
    %vm42 = vmor %vm38, %vm41
    %vm43 = vcmp.ge.s32.totalorder %v35, 17
    %vm44 = vcmp.lt.s32.totalorder %v35, 21
    %vm45 = vmand %vm43, %vm44
    %vm46 = vmor %vm42, %vm45
    %v47 = vmul.f32 %v31, %v31
    %v48 = vmul.f32 %v32, %v32
    %v49 = vmul.f32 %v33, %v33
    %v50 = vsel %vm38, %v47, 0.0
    %v51 = vsel %vm38, %v48, 0.0
    %v52 = vsel %vm38, %v49, 0.0
    %vm53 = vcmask 171008
    %v54 = vsel %vm53, %v50, 0.0
    %v55 = vsel %vm53, %v51, 0.0
    %v56 = vadd.f32 %v54, %v55
    %vm57 = vcmask 166912
    %v58 = vsel %vm57, %v52, 0.0
    %v59 = vadd.f32 %v56, %v58
    %60 = vadd.xlane.f32.xlu0 %v59
    %v61 = vpop.xlane.xlu0 %60
    %v62 = vrot.slane %v61, 4
    %v63 = vadd.f32 %v61, %v62
    %v64 = vrot.slane %v63, 2
    %v65 = vadd.f32 %v63, %v64
    %v66 = vrot.slane %v65, 1
    %v67 = vadd.f32 %v65, %v66
    %s68 = vtos %v67
    %v69 = vstv %s68
    %v70 = vrcp.pop %v69
    %v71 = vmul.f32 %v69, %v70
    %v72 = vsub.f32 1.0, %v71
    %v73 = vmul.f32 %v70, %v72
    %v74 = vadd.f32 %v70, %v73
    %vm75 = vweird.f32 %v69
    %vm76 = vweird.f32 %v70
    %vm77 = vmor %vm75, %vm76
    %v78 = vsel %vm77, %v70, %v74
    %v79 = vand.u32 2147483647, %v69
    %vm80 = vcmp.eq.f32.partialorder %v79, 8.507059e+37
    %v81 = vand.u32 %v69, 2147483648
    %v82 = vor.u32 1.1754944e-38, %v81
    %v83 = vsel %vm80, %v82, %v78
    %s84 = vtos %v83
    %s85 = smul.f32 80.0, %s84
    %v86 = vstv %s85
    %v87 = vmul.f32 %v31, %v86
    %v88 = vmul.f32 %v32, %v86
    %v89 = vmul.f32 %v33, %v86
    %v90 = vsel %vm46, %v87, %v31
    %v91 = vsel %vm46, %v88, %v32
    %v92 = vsel %vm46, %v89, %v33
    %v93 = vsub.f32 %v28, %v90
    %v94 = vsub.f32 %v29, %v91
    %v95 = vsub.f32 %v30, %v92
    %s96 = sld [smem:[#allocation2]]
    %s97 = sld [smem:[#allocation2 + $0x1]]
    %s98 = sld [smem:[#allocation2 + $0x2]]
    %s99 = sld [smem:[#allocation2 + $0x3]]
    %s100 = sld [smem:[#allocation2 + $0x4]]
    %s101 = sld [smem:[#allocation2 + $0x5]]
    %v102 = vstv %s97
    %v103 = vstv %s98
    %v104 = vsel %vm40, %v102, %v103
    %v105 = vstv %s96
    %v106 = vsel %vm37, %v105, %v104
    %v107 = vstv %s100
    %v108 = vstv %s101
    %v109 = vsel %vm40, %v107, %v108
    %v110 = vstv %s99
    %v111 = vsel %vm37, %v110, %v109
    %v112 = vmul.f32 %v111, 0.0125
    %v113 = vsel %vm46, %v112, 0.016666668
    %v114 = vmul.f32 %v106, %v113
    %v115 = vmul.f32 %v114, %v93
    %v116 = vmul.f32 %v114, %v94
    %v117 = vmul.f32 %v114, %v95
    %v118 = vmul.f32 %v115, %v93
    %v119 = vmul.f32 %v116, %v94
    %v120 = vmul.f32 %v117, %v95
    %v121 = vsel %vm53, %v118, 0.0
    %v122 = vsel %vm53, %v119, 0.0
    %v123 = vadd.f32 %v121, %v122
    %v124 = vsel %vm57, %v120, 0.0
    %v125 = vadd.f32 %v123, %v124
    %126 = vadd.xlane.f32.xlu0 %v125
    %v127 = vpop.xlane.xlu0 %126
    %v128 = vrot.slane %v127, 4
    %v129 = vadd.f32 %v127, %v128
    %v130 = vrot.slane %v129, 2
    %v131 = vadd.f32 %v129, %v130
    %v132 = vrot.slane %v131, 1
    %v133 = vadd.f32 %v131, %v132
    %s134 = vtos %v133
    %s135 = scalar_lea.smem [#allocation5], 0
    %136 = sst [smem:[%s135]] %s134
    // Predicated region
    $region18: #{pose_loss.1} parent=1 // pred_check
      _
    $region19: #{pose_loss.1} parent=1 // pred_check_branch
      %138 = sbr.rel (0) target = $region21
    $region20: #{pose_loss.1} parent=1 // pred_region
      %140 = vsyncadd [#allocation3], 0
      %s142 = sshll.u32 %s3, 4
      %s143 = int_to_ptr.hbm [resolvable:$true] %s142
      %145 = dma.smem_to_hbm [#allocation5], 16, %s143, [#allocation3]
    $region21: #{pose_loss.1} parent=1 // pred_fallthru
      _
    // Predicated region
    $region22: #{pose_loss.1} parent=1 // pred_check
      _
    $region23: #{pose_loss.1} parent=1 // pred_check_branch
      %147 = sbr.rel (0) target = $region25
    $region24: #{pose_loss.1} parent=1 // pred_region
      %149 = dma.done [#allocation3], 16
    $region25: #{pose_loss.1} parent=1 // pred_fallthru
      _
    %150 = sfence
    %151 = vsyncpa [#allocation3], 1
    %152 = vsyncpa [#allocation4], 1

</llo_original>
